<compile_context>
chip_gen: v5e
topology: v5e:2x2
jax: 0.10.0
libtpu: 0.0.40
codegen_flags: <defaults>
</compile_context>

<pallas_src>
import functools

import jax
import jax.numpy as jnp
from jax.experimental import pallas as pl
from jax.experimental.pallas import tpu as pltpu


def _accuracy_kernel(logits_ref, label_ref, count_ref, acc_ref, *,
                     n_total, rows_per_block, steps_per_core):
    core = pl.program_id(0)       # TensorCore split ("parallel" axis)
    step = pl.program_id(1)       # streaming reduction ("arbitrary" axis)

    @pl.when(step == 0)
    def _():
        acc_ref[...] = jnp.zeros_like(acc_ref)

    logits = logits_ref[...]      # (TN, C), native dtype (f32 / bf16)
    labels = label_ref[...]       # (TN, 1), int32
    tn, c = logits.shape

    # argmax over the class axis — FIRST maximal index on ties (== torch.max).
    max_vals = jnp.max(logits, axis=1, keepdims=True)                   # (TN,1)
    ids = jax.lax.broadcasted_iota(jnp.int32, (tn, c), 1)               # (TN,C)
    argmax = jnp.min(jnp.where(logits == max_vals, ids, c),
                     axis=1, keepdims=True)                             # (TN,1)

    # Mask rows beyond the true batch size (partial / phantom edge blocks).
    base = (core * steps_per_core + step) * rows_per_block
    row = jax.lax.broadcasted_iota(jnp.int32, (tn, 1), 0) + base        # (TN,1)
    valid = row < n_total

    correct = jnp.logical_and(argmax == labels, valid)                  # (TN,1)
    # Steady-state accumulation stays in the vector domain (VMEM (1,1) scratch);
    # the scalar extract + SMEM write happens once per core, below.
    acc_ref[...] += jnp.sum(correct.astype(jnp.int32), keepdims=True)

    @pl.when(step == pl.num_programs(1) - 1)
    def _():
        count_ref[0, 0] = jnp.sum(acc_ref[...])


def _accuracy_xla(output, labels_i32, n):
    # Fallback for shapes the streaming kernel cannot tile (very large C).
    correct = (jnp.argmax(output, axis=1).astype(jnp.int32).reshape(n, 1)
               == labels_i32).sum()
    return (correct.astype(jnp.float32) / jnp.float32(n)).astype(output.dtype).reshape(1)


def accuracy(output: jax.Array, label: jax.Array, *,
             tile_vmem_bytes: int = 8 << 20, num_cores: int = 2) -> jax.Array:
    """Caffe/PyTorch `Accuracy` forward.

    output: (N, C) logits; label: (N,) class ids (float or int).
    Returns a (1,)-shaped array holding the accuracy, in output.dtype.

    tile_vmem_bytes: per-buffer VMEM budget for the streamed (rows, C) logits
      tile (double-buffered by the pipeline).  8 MiB fits every generation's
      scoped-VMEM limit; v6e (128 MiB physical) can take 16 MiB.
    num_cores: batch split across TensorCores (2 = v7x megacore; harmless on
      the single-core v5e/v6e where the "parallel" axis just iterates).
    """
    n, c = output.shape
    itemsize = jnp.dtype(output.dtype).itemsize

    # torch compares max_ids.float() == label: a non-integer float label can
    # never match an integer argmax, so map it to class -1 (never correct).
    if jnp.issubdtype(label.dtype, jnp.floating):
        li = label.astype(jnp.int32)
        li = jnp.where(li.astype(label.dtype) == label, li, jnp.int32(-1))
    else:
        li = label.astype(jnp.int32)
    labels_i32 = li.reshape(n, 1)

    # Per-row VMEM cost: one logits row + the lane-padded (TN,1) int32 label
    # row (1 lane used, 128 allocated).  Tile rows come purely from the byte
    # budget — no artificial row cap.
    bytes_per_row = c * itemsize + 128 * 4

    if n * bytes_per_row <= tile_vmem_bytes:
        tn, num_cores = n, 1                      # whole batch in one block
    else:
        tn = (tile_vmem_bytes // bytes_per_row) // 8 * 8
        if tn < 8:
            # TODO(synk): C-tiled running-argmax variant for >~250K-class
            # logits; plain XLA fallback keeps correctness meanwhile.
            return _accuracy_xla(output, labels_i32, n)

    num_blocks = pl.cdiv(n, tn)
    if num_blocks < num_cores:
        num_cores = 1
    steps_per_core = pl.cdiv(num_blocks, num_cores)
    last_block = num_blocks - 1

    # Phantom trailing blocks (when num_blocks does not split evenly across
    # cores) are clamped to the last real block; their rows fail the
    # `row < n` mask inside the kernel, so they contribute nothing.
    def block_map(cr, s):
        return (jnp.minimum(cr * steps_per_core + s, last_block), 0)

    buffer_bytes = tn * bytes_per_row
    vmem_limit = max(2 * buffer_bytes + (4 << 20), 16 << 20)

    kernel = functools.partial(_accuracy_kernel, n_total=n,
                               rows_per_block=tn, steps_per_core=steps_per_core)

    counts = pl.pallas_call(
        kernel,
        out_shape=jax.ShapeDtypeStruct((num_cores, 1), jnp.int32),
        grid_spec=pltpu.PrefetchScalarGridSpec(
            num_scalar_prefetch=0,
            grid=(num_cores, steps_per_core),
            in_specs=[
                pl.BlockSpec((tn, c), block_map),
                pl.BlockSpec((tn, 1), block_map),
            ],
            out_specs=pl.BlockSpec((1, 1), lambda cr, s: (cr, 0),
                                   memory_space=pltpu.MemorySpace.SMEM),
            scratch_shapes=[pltpu.VMEM((1, 1), jnp.int32)],
        ),
        compiler_params=pltpu.CompilerParams(
            dimension_semantics=("parallel", "arbitrary"),
            vmem_limit_bytes=vmem_limit),
        cost_estimate=pl.CostEstimate(
            flops=3 * n * c,
            transcendentals=0,
            bytes_accessed=n * c * itemsize + 4 * n + 4 * num_cores),
    )(output, labels_i32)

    total = jnp.sum(counts)
    acc = (total.astype(jnp.float32) / jnp.float32(n)).astype(output.dtype)
    return acc.reshape(1)


if __name__ == "__main__":
    key = jax.random.PRNGKey(0)
    k1, k2, k3, k4 = jax.random.split(key, 4)

    # Case 1: small, single-block path (module-scale toy shapes).
    N, C = 8, 16
    logits = jax.random.normal(k1, (N, C), dtype=jnp.float32)
    labels = jax.random.randint(k2, (N,), 0, C).astype(jnp.float32)
    acc = accuracy(logits, labels)
    jax.block_until_ready(acc)
    ref = (jnp.argmax(logits, axis=1).astype(jnp.float32) == labels).sum() / N
    assert acc.shape == (1,)
    assert jnp.allclose(acc[0], ref), (acc, ref)

    # Case 2: multi-block + 2-TensorCore split + partial/phantom edge blocks
    # (tn=8 -> 5 blocks over 2 cores, last core has a masked phantom block).
    N2, C2 = 40, 16
    logits2 = jax.random.normal(k3, (N2, C2), dtype=jnp.float32)
    labels2 = jax.random.randint(k4, (N2,), 0, C2).astype(jnp.float32)
    acc2 = accuracy(logits2, labels2, tile_vmem_bytes=8192)
    jax.block_until_ready(acc2)
    ref2 = (jnp.argmax(logits2, axis=1).astype(jnp.float32) == labels2).sum() / N2
    assert jnp.allclose(acc2[0], ref2), (acc2, ref2)

    # The PyTorch module also prints the accuracy value:
    print("accuracy = %f" % float(acc[0]))
    print("accuracy = %f" % float(acc2[0]))
    print("KERNEL_OK")
</pallas_src>

<mosaic_0001>
module attributes {stable_mosaic.version = 11 : i64} {
  func.func @_accuracy_kernel(%arg0: i32, %arg1: i32, %arg2: memref<8x16xf32, #tpu.memory_space<vmem>>, %arg3: memref<8x1xi32, #tpu.memory_space<vmem>>, %arg4: memref<1x1xi32, #tpu.memory_space<smem>>, %arg5: memref<1x1xi32, #tpu.memory_space<vmem>>) attributes {dimension_semantics = [#tpu.dimension_semantics<parallel>, #tpu.dimension_semantics<arbitrary>], iteration_bounds = array<i64: 1, 1>, scalar_prefetch = 0 : i64, scratch_operands = 1 : i64, tpu.core_type = #tpu.core_type<tc>, window_params = [{transform_indices = @transform_0, window_bounds = array<i64: 8, 16>}, {transform_indices = @transform_1, window_bounds = array<i64: 8, 1>}, {transform_indices = @transform_2, window_bounds = array<i64: 1, 1>}]} {
    %c0_i32 = arith.constant 0 : i32
    %0 = arith.cmpi eq, %arg1, %c0_i32 : i32
    %1 = arith.extui %0 : i1 to i32
    %c0_i32_0 = arith.constant 0 : i32
    %2 = arith.cmpi ne, %1, %c0_i32_0 : i32
    scf.if %2 {
      %c0_i32_13 = arith.constant 0 : i32
      %36 = vector.broadcast %c0_i32_13 : i32 to vector<1x1xi32>
      %c0_14 = arith.constant 0 : index
      %c0_15 = arith.constant 0 : index
      %37 = vector.load %arg5[%c0_14, %c0_15] : memref<1x1xi32, #tpu.memory_space<vmem>>, vector<1x1xi32>
      tpu.vector_store %arg5[%c0_14, %c0_15], %36 {strides = array<i32>} : memref<1x1xi32, #tpu.memory_space<vmem>>, vector<1x1xi32>,
    } else {
    }
    %c0 = arith.constant 0 : index
    %c0_1 = arith.constant 0 : index
    %3 = vector.load %arg2[%c0, %c0_1] : memref<8x16xf32, #tpu.memory_space<vmem>>, vector<8x16xf32>
    %c0_2 = arith.constant 0 : index
    %c0_3 = arith.constant 0 : index
    %4 = vector.load %arg3[%c0_2, %c0_3] : memref<8x1xi32, #tpu.memory_space<vmem>>, vector<8x1xi32>
    %cst = arith.constant dense<0xFF800000> : vector<8xf32>
    %5 = vector.multi_reduction <maximumf>, %3, %cst [1] : vector<8x16xf32> to vector<8xf32>
    %6 = vector.shape_cast %5 : vector<8xf32> to vector<8x1xf32>
    %7 = tpu.iota {dimensions = array<i32: 1>} : vector<8x16xi32>
    %8 = vector.broadcast %6 : vector<8x1xf32> to vector<8x16xf32>
    %9 = arith.cmpf oeq, %3, %8 : vector<8x16xf32>
    %c16_i32 = arith.constant 16 : i32
    %10 = vector.broadcast %c16_i32 : i32 to vector<8x16xi32>
    %11 = arith.select %9, %7, %10 : vector<8x16xi1>, vector<8x16xi32>
    %cst_4 = arith.constant dense<2147483647> : vector<8xi32>
    %12 = vector.multi_reduction <minsi>, %11, %cst_4 [1] : vector<8x16xi32> to vector<8xi32>
    %13 = vector.shape_cast %12 : vector<8xi32> to vector<8x1xi32>
    %c1_i32 = arith.constant 1 : i32
    %14 = arith.muli %arg0, %c1_i32 : i32
    %15 = arith.addi %14, %arg1 : i32
    %c8_i32 = arith.constant 8 : i32
    %16 = arith.muli %15, %c8_i32 : i32
    %17 = tpu.iota {dimensions = array<i32: 0>} : vector<8x1xi32>
    %18 = vector.broadcast %16 : i32 to vector<8x1xi32>
    %19 = arith.addi %17, %18 : vector<8x1xi32>
    %c8_i32_5 = arith.constant 8 : i32
    %20 = vector.broadcast %c8_i32_5 : i32 to vector<8x1xi32>
    %21 = arith.cmpi slt, %19, %20 : vector<8x1xi32>
    %22 = arith.cmpi eq, %13, %4 : vector<8x1xi32>
    %23 = arith.andi %22, %21 : vector<8x1xi1>
    %c0_6 = arith.constant 0 : index
    %c0_7 = arith.constant 0 : index
    %24 = vector.load %arg5[%c0_6, %c0_7] : memref<1x1xi32, #tpu.memory_space<vmem>>, vector<1x1xi32>
    %25 = arith.extui %23 : vector<8x1xi1> to vector<8x1xi32>
    %26 = vector.shape_cast %25 : vector<8x1xi32> to vector<1x8x1xi32>
    %cst_8 = arith.constant dense<0> : vector<1xi32>
    %27 = vector.multi_reduction <add>, %26, %cst_8 [1, 2] : vector<1x8x1xi32> to vector<1xi32>
    %28 = vector.shape_cast %27 : vector<1xi32> to vector<1x1x1xi32>
    %29 = vector.extract %28[0, 0, 0] : i32 from vector<1x1x1xi32>
    %30 = vector.broadcast %29 : i32 to vector<1x1xi32>
    %31 = arith.addi %24, %30 : vector<1x1xi32>
    %c0_9 = arith.constant 0 : index
    %c0_10 = arith.constant 0 : index
    %32 = vector.load %arg5[%c0_9, %c0_10] : memref<1x1xi32, #tpu.memory_space<vmem>>, vector<1x1xi32>
    tpu.vector_store %arg5[%c0_9, %c0_10], %31 {strides = array<i32>} : memref<1x1xi32, #tpu.memory_space<vmem>>, vector<1x1xi32>,
    %c0_i32_11 = arith.constant 0 : i32
    %33 = arith.cmpi eq, %arg1, %c0_i32_11 : i32
    %34 = arith.extui %33 : i1 to i32
    %c0_i32_12 = arith.constant 0 : i32
    %35 = arith.cmpi ne, %34, %c0_i32_12 : i32
    scf.if %35 {
      %c0_13 = arith.constant 0 : index
      %c0_14 = arith.constant 0 : index
      %36 = vector.load %arg5[%c0_13, %c0_14] : memref<1x1xi32, #tpu.memory_space<vmem>>, vector<1x1xi32>
      %37 = vector.shape_cast %36 : vector<1x1xi32> to vector<1x1x1xi32>
      %cst_15 = arith.constant dense<0> : vector<1xi32>
      %38 = vector.multi_reduction <add>, %37, %cst_15 [1, 2] : vector<1x1x1xi32> to vector<1xi32>
      %39 = vector.shape_cast %38 : vector<1xi32> to vector<1x1x1xi32>
      %40 = vector.extract %39[0, 0, 0] : i32 from vector<1x1x1xi32>
      %c0_16 = arith.constant 0 : index
      %c0_17 = arith.constant 0 : index
      %41 = memref.load %arg4[%c0_16, %c0_17] : memref<1x1xi32, #tpu.memory_space<smem>>
      memref.store %40, %arg4[%c0_16, %c0_17] : memref<1x1xi32, #tpu.memory_space<smem>>
    } else {
    }
    return
  }
  func.func @transform_0(%arg0: i32, %arg1: i32) -> (i32, i32) {
    %c1_i32 = arith.constant 1 : i32
    %0 = arith.muli %arg0, %c1_i32 : i32
    %1 = arith.addi %0, %arg1 : i32
    %c0_i32 = arith.constant 0 : i32
    %2 = arith.minsi %1, %c0_i32 : i32
    %c0_i32_0 = arith.constant 0 : i32
    %c0_i32_1 = arith.constant 0 : i32
    return %2, %c0_i32_0 : i32, i32
  }
  func.func @transform_1(%arg0: i32, %arg1: i32) -> (i32, i32) {
    %c1_i32 = arith.constant 1 : i32
    %0 = arith.muli %arg0, %c1_i32 : i32
    %1 = arith.addi %0, %arg1 : i32
    %c0_i32 = arith.constant 0 : i32
    %2 = arith.minsi %1, %c0_i32 : i32
    %c0_i32_0 = arith.constant 0 : i32
    %c0_i32_1 = arith.constant 0 : i32
    return %2, %c0_i32_0 : i32, i32
  }
  func.func @transform_2(%arg0: i32, %arg1: i32) -> (i32, i32) {
    %c0_i32 = arith.constant 0 : i32
    %c0_i32_0 = arith.constant 0 : i32
    return %arg0, %c0_i32 : i32, i32
  }
}

</mosaic_0001>

<llo_original>
// kernel: tpu_custom_call.1
$region0: #{tpu_custom_call.1}
  #allocation0 [shape = 'u32[]', space=smem, size = 0x4, offset = 0x4, fixed_abs, tag = 'smem constant byte address 0x4 - core index']
  #allocation1 [shape = 'u32[72,128]{1,0:T(1,128)}', space=vmem, size = 0x9000, scoped, tag = 'internal scratch']
  #allocation2 [shape = 's32[1,1]{1,0:T(1,128)}', space=vmem, size = 0x200, scoped, tag = 'scratch operand']
  %s0 = inlined_call_operand.vmem [shape: f32[8,16], index: 0, kind: input, shape index: {}]
  %s1 = inlined_call_operand.vmem [shape: s32[8,1], index: 1, kind: input, shape index: {}]
  %s2 = inlined_call_operand.hbm [shape: s32[1,1], index: 2, kind: output, shape index: {}]
  %s3 = sld [smem:[#allocation0]]
  $region26: #{tpu_custom_call.1} parent=0
    _
  %s5 = ssub.s32 1, %s3
  %s6 = scalar_select 0, %s5, %s3
  $region1: #{tpu_custom_call.1} parent=0
    #allocation3 [shape = 'u8[512]{0}', space=smem, size = 0x200, scoped, tag = 'output window, operand 0, single buffered']
    #allocation4 [shape = 's32[1]{0}', space=sflag, size = 0x4, scoped, tag = 'scoped memory for tpu_custom_call.1']
    %7 = vsyncpa [#allocation4], 0
    // Predicated region
    $region2: #{tpu_custom_call.1} parent=1 // pred_check
      _
    $region3: #{tpu_custom_call.1} parent=1 // pred_check_branch
      %9 = sbr.rel (0) target = $region5
    $region4: #{tpu_custom_call.1} parent=1 // pred_region
      %s10 = sadd.s32 0, 0
      %p11 = scmp.lt.s32.totalorder %s10, 0
      %s12 = scalar_select %p11, %s10, 0
      %p13 = scmp.lt.s32.totalorder %s12, 0
      %s14 = scalar_select %p13, %s12, 0
      %s15 = smul.addr %s14, 8
      %s16 = scalar_lea.vmem %s0, %s15
      %s17 = sadd.s32 0, 0
      %p18 = scmp.lt.s32.totalorder %s17, 0
      %s19 = scalar_select %p18, %s17, 0
    $region5: #{tpu_custom_call.1} parent=1 // pred_fallthru
      _
    // Predicated region
    $region6: #{tpu_custom_call.1} parent=1 // pred_check
      _
    $region7: #{tpu_custom_call.1} parent=1 // pred_check_branch
      %21 = sbr.rel (0) target = $region9
    $region8: #{tpu_custom_call.1} parent=1 // pred_region
      %s22 = sadd.s32 0, 0
      %p23 = scmp.lt.s32.totalorder %s22, 0
      %s24 = scalar_select %p23, %s22, 0
      %p25 = scmp.lt.s32.totalorder %s24, 0
      %s26 = scalar_select %p25, %s24, 0
      %s27 = smul.addr %s26, 8
      %s28 = scalar_lea.vmem %s1, %s27
      %s29 = sadd.s32 0, 0
      %p30 = scmp.lt.s32.totalorder %s29, 0
      %s31 = scalar_select %p30, %s29, 0
    $region9: #{tpu_custom_call.1} parent=1 // pred_fallthru
      _
    %s32 = sadd.s32 0, 0
    %p33 = scmp.lt.s32.totalorder %s32, 0
    %s34 = scalar_select %p33, %s32, 0
    %p35 = scmp.lt.s32.totalorder %s34, 0
    %s36 = scalar_select %p35, %s34, 0
    %s37 = smul.addr %s36, 8
    %s38 = scalar_lea.vmem %s0, %s37
    %s39 = sadd.s32 0, 0
    %p40 = scmp.lt.s32.totalorder %s39, 0
    %s41 = scalar_select %p40, %s39, 0
    %p42 = scmp.lt.s32.totalorder %s41, 0
    %s43 = scalar_select %p42, %s41, 0
    %s44 = smul.addr %s43, 8
    %s45 = scalar_lea.vmem %s1, %s44
    %s46 = sadd.s32 0, 0
    %p47 = scmp.lt.s32.totalorder %s46, 0
    %s48 = scalar_select %p47, %s46, 0
    %p49 = scmp.lt.s32.totalorder %s48, 0
    %s50 = scalar_select %p49, %s48, 0
    %s51 = smul.addr %s50, 8
    %s52 = scalar_lea.vmem %s0, %s51
    %s53 = sadd.s32 0, 0
    %p54 = scmp.lt.s32.totalorder %s53, 0
    %s55 = scalar_select %p54, %s53, 0
    %s56 = sadd.s32 0, 0
    %p57 = scmp.lt.s32.totalorder %s56, 0
    %s58 = scalar_select %p57, %s56, 0
    %p59 = scmp.lt.s32.totalorder %s58, 0
    %s60 = scalar_select %p59, %s58, 0
    %s61 = smul.addr %s60, 8
    %s62 = scalar_lea.vmem %s1, %s61
    %s63 = sadd.s32 0, 0
    %p64 = scmp.lt.s32.totalorder %s63, 0
    %s65 = scalar_select %p64, %s63, 0
    %p66 = scmp.eq.s32.totalorder 0, 0
    // Predicated region
    $region10: #{tpu_custom_call.1} parent=1 // pred_check
      %p67 = pneg %p66
    $region11: #{tpu_custom_call.1} parent=1 // pred_check_branch
      %69 = sbr.rel (%p67) target = $region13
    $region12: #{tpu_custom_call.1} parent=1 // pred_region
      %vm70 = vcmask 0
      %71 = vst.msk [vmem:[#allocation2] sm:$0x1] %vm70, 0
    $region13: #{tpu_custom_call.1} parent=1 // pred_fallthru
      _
    %v72 = vld [vmem:[%s52] sm:$0xff]
    %v73 = vld [vmem:[%s62] sm:$0xff]
    %vm74 = vcmask 130048
    %v75 = vsel %vm74, %v72, -inf
    %76 = vmax.xlane.f32.xlu0 %v75
    %v77 = vpop.xlane.xlu0 %76
    %v78 = vlaneseq
    %v79 = vand.u32 %v78, 127
    %vm80 = vcmp.eq.f32.partialorder %v72, %v77
    %v81 = vsel %vm80, %v79, 16
    %v82 = vsel %vm74, %v81, 2147483647
    %v83 = vand.u32 %v82, 65535
    %v84 = vshra.s32 %v82, 16
    %v85 = vcvt.s32.f32 %v83
    %v86 = vcvt.s32.f32 %v84
    %87 = vmin.xlane.f32.xlu0 %v86
    %v88 = vpop.xlane.xlu0 %87
    %vm89 = vcmp.eq.f32.partialorder %v86, %v88
    %v90 = vsel %vm89, %v85, inf
    %91 = vmin.xlane.f32.xlu0 %v90
    %v92 = vpop.xlane.xlu0 %91
    %v93 = vcvt.f32.s32 %v92
    %v94 = vcvt.f32.s32 %v88
    %v95 = vshll.u32 %v94, 16
    %v96 = vadd.s32 %v95, %v93
    %s97 = sadd.s32 0, 0
    %s98 = smul.u32 %s97, 8
    %v99 = vlaneseq
    %v100 = vshrl.u32 %v99, 7
    %v101 = vstv %s98
    %v102 = vadd.s32 %v100, %v101
    %vm103 = vcmp.lt.s32.totalorder %v102, 8
    %vm104 = vcmp.eq.s32.totalorder %v96, %v73
    %vm105 = vmand %vm104, %vm103
    %v106 = vld [vmem:[#allocation2] sm:$0x1]
    %v107 = vsel %vm105, 1, 0
    %vm108 = vcmask 7168
    %v109 = vsel %vm108, %v107, 0
    %v110 = vand.u32 %v109, 65535
    %v111 = vshrl.u32 %v109, 16
    %v112 = vcvt.s32.f32 %v110
    %v113 = vcvt.s32.f32 %v111
    %114 = vadd.xlane.f32.xlu0 %v112
    %v115 = vpop.xlane.xlu0 %114
    %116 = vadd.xlane.f32.xlu0 %v113
    %v117 = vpop.xlane.xlu0 %116
    %v118 = vcvt.f32.s32 %v115
    %v119 = vcvt.f32.s32 %v117
    %v120 = vshll.u32 %v119, 16
    %v121 = vadd.s32 %v120, %v118
    %v122 = vrot.slane %v121, 4
    %v123 = vadd.s32 %v121, %v122
    %v124 = vrot.slane %v123, 2
    %v125 = vadd.s32 %v123, %v124
    %v126 = vrot.slane %v125, 1
    %v127 = vadd.s32 %v125, %v126
    %s128 = vtos %v127
    %v129 = vstv %s128
    %v130 = vadd.s32 %v106, %v129
    %vm131 = vcmask 0
    %132 = vst.msk [vmem:[#allocation2] sm:$0x1] %vm131, %v130
    // Predicated region
    $region14: #{tpu_custom_call.1} parent=1 // pred_check
      %p133 = pneg %p66
    $region15: #{tpu_custom_call.1} parent=1 // pred_check_branch
      %135 = sbr.rel (%p133) target = $region17
    $region16: #{tpu_custom_call.1} parent=1 // pred_region
      %v136 = vld [vmem:[#allocation2] sm:$0x1]
      %s137 = vtos %v136
      %s138 = scalar_lea.smem [#allocation3], 0
      %139 = sst [smem:[%s138]] %s137
    $region17: #{tpu_custom_call.1} parent=1 // pred_fallthru
      _
    // Predicated region
    $region18: #{tpu_custom_call.1} parent=1 // pred_check
      _
    $region19: #{tpu_custom_call.1} parent=1 // pred_check_branch
      %141 = sbr.rel (0) target = $region21
    $region20: #{tpu_custom_call.1} parent=1 // pred_region
      %143 = vsyncadd [#allocation4], 0
      %s145 = sshll.u32 %s2, 4
      %s146 = int_to_ptr.hbm [resolvable:$true] %s145
      %148 = dma.smem_to_hbm [#allocation3], 16, %s146, [#allocation4]
    $region21: #{tpu_custom_call.1} parent=1 // pred_fallthru
      _
    // Predicated region
    $region22: #{tpu_custom_call.1} parent=1 // pred_check
      _
    $region23: #{tpu_custom_call.1} parent=1 // pred_check_branch
      %150 = sbr.rel (0) target = $region25
    $region24: #{tpu_custom_call.1} parent=1 // pred_region
      %152 = dma.done [#allocation4], 16
    $region25: #{tpu_custom_call.1} parent=1 // pred_fallthru
      _
    %153 = sfence
    %154 = vsyncpa [#allocation4], 1

</llo_original>
